<compile_context>
chip_gen: v6e
topology: v6e:2x2x1
jax: 0.10.0
libtpu: 0.0.40
codegen_flags: <defaults>
</compile_context>

<pallas_src>
import jax
import jax.numpy as jnp
from jax.experimental import pallas as pl
from jax.experimental.pallas import tpu as pltpu


def _pooler_kernel(x_ref, w_ref, b_ref, o_ref):
    # x_ref: (TM, H_in)    activation tile (input dtype; cast per-tile on the VPU)
    # w_ref: (H_in, H_out) weight pre-transposed to NN layout, VMEM-resident
    # b_ref: (1, H_out)    f32 bias
    # o_ref: (TM, H_out)   output tile (lane-dense: H_out % 128 == 0 for BERT)
    x = x_ref[...].astype(w_ref.dtype)
    y = jnp.dot(x, w_ref[...], preferred_element_type=jnp.float32)  # NN matmul on MXU
    y = y + b_ref[...]                                              # f32 bias add
    o_ref[...] = jnp.tanh(y).astype(o_ref.dtype)                    # EUP tanh, cast at store
    # TODO(synk): dropout is identity in eval mode; a training-mode mask would use
    # pltpu.prng_seed + pltpu.stateful_bernoulli in-kernel.


def _round_up(x, m):
    return ((x + m - 1) // m) * m


def _round_down8(x):
    return (x // 8) * 8


def _num_tensorcores():
    """Best-effort TensorCores per device (v7x has 2; v5e/v6e have 1)."""
    try:
        dev = jax.devices()[0]
        kind = str(getattr(dev, "device_kind", "")).lower()
        cores = int(getattr(dev, "num_cores", 1) or 1)
        if "v7" in kind:
            cores = max(cores, 2)
        return max(cores, 1)
    except Exception:
        return 1


def _vmem_budget_bytes():
    """~75% of physical VMEM: leaves compiler-internal-scratch headroom (esp. v7x 64 MiB)."""
    cap = 64 << 20
    try:
        info = pltpu.get_tpu_info()
        cap = int(getattr(info, "vmem_capacity_bytes", cap))
    except Exception:
        pass
    return (cap * 3) // 4


def _pick_tm(batch, block_b, num_cores):
    tm = max(min(block_b, batch), 1)
    if tm % 8 != 0:
        # Round DOWN to a multiple of 8 and let Pallas mask the partial last tile;
        # only truly tiny batches fall back to one full-extent block.
        tm = _round_down8(tm) if tm > 8 else batch
    # Multi-TensorCore chips (v7x): guarantee >= num_cores tiles so the "parallel"
    # grid axis actually shards the batch across both cores.
    if num_cores > 1 and batch >= 8 * num_cores and pl.cdiv(batch, tm) < num_cores:
        tm = min(tm, _round_up(pl.cdiv(batch, num_cores), 8))
    return max(tm, 1)


def _run_pooler(x, weight, bias, *, cls_from_seq, block_b, compute_dtype, out_dtype):
    if cls_from_seq:
        batch, _seq, h_in = x.shape
    else:
        batch, h_in = x.shape
    h_out, h_in_w = weight.shape
    assert h_in_w == h_in, "weight must be (H_out, H_in) with H_in == hidden size of x"
    assert bias.shape == (h_out,)
    out_dtype = x.dtype if out_dtype is None else out_dtype

    # One-time parameter prep (constant-folded / cached under jit): the transpose is
    # fused into the cast so the kernel runs a plain NN matmul. Activations are NOT
    # cast in the wrapper (that would add an extra HBM pass) — they are cast per-tile
    # on the VPU inside the kernel.
    w = weight.T.astype(compute_dtype)                    # (H_in, H_out)
    b2d = bias.reshape(1, h_out).astype(jnp.float32)

    x_isz = jnp.dtype(x.dtype).itemsize
    w_isz = jnp.dtype(compute_dtype).itemsize
    o_isz = jnp.dtype(out_dtype).itemsize

    num_cores = _num_tensorcores()
    budget = _vmem_budget_bytes()
    tm = _pick_tm(batch, block_b, num_cores)

    x_buffers = 3 if cls_from_seq else 2                  # extra buffer hides strided CLS DMA

    def footprint(t):
        return (x_buffers * t * h_in * x_isz              # pipelined activation tiles
                + 2 * t * h_out * o_isz                   # pipelined output tiles
                + 2 * h_out * h_in * w_isz                # weight (conservatively x2)
                + 2 * h_out * 4)                          # bias

    while tm > 64 and footprint(tm) > budget:             # mem-bound: biggest tile that fits
        tm = max(_round_down8(tm // 2), 8)

    grid = (pl.cdiv(batch, tm),)
    vmem_limit = int(min(max(2 * footprint(tm), 8 << 20), budget))

    cost = pl.CostEstimate(
        flops=2 * batch * h_in * h_out,
        transcendentals=batch * h_out,
        bytes_accessed=(batch * h_in * x_isz + h_out * h_in * w_isz
                        + h_out * 4 + batch * h_out * o_isz),
    )

    def call(use_buffer_hints):
        def spec(shape, imap, buffers=None):
            if use_buffer_hints and buffers is not None and hasattr(pl, "Buffered"):
                try:
                    return pl.BlockSpec(shape, imap, pipeline_mode=pl.Buffered(buffers))
                except TypeError:
                    pass
            return pl.BlockSpec(shape, imap)

        if cls_from_seq:
            # Squeezed seq dim pinned at block 0: only the CLS (token-0) rows are DMA'd.
            x_spec = spec((tm, None, h_in), lambda i: (i, 0, 0), buffers=3)
        else:
            x_spec = spec((tm, h_in), lambda i: (i, 0))
        in_specs = [
            x_spec,
            spec((h_in, h_out), lambda i: (0, 0), buffers=1),   # weight: fetched once, VMEM-resident
            spec((1, h_out), lambda i: (0, 0), buffers=1),      # bias:   fetched once
        ]
        return pl.pallas_call(
            _pooler_kernel,
            out_shape=jax.ShapeDtypeStruct((batch, h_out), out_dtype),
            grid_spec=pl.GridSpec(
                grid=grid,
                in_specs=in_specs,
                out_specs=pl.BlockSpec((tm, h_out), lambda i: (i, 0)),  # lane-dense output
            ),
            compiler_params=pltpu.CompilerParams(
                dimension_semantics=("parallel",),   # shard batch tiles across TCs (v7x)
                vmem_limit_bytes=vmem_limit,
            ),
            cost_estimate=cost,
        )(x, w, b2d)

    try:
        return call(True)
    except Exception:
        # pipeline_mode buffer hints are an optimization only; fall back to default
        # double-buffering if this Pallas build rejects them.
        return call(False)


def bert_cls_pooler(hidden_states, weight, bias, *, block_b=1024,
                    compute_dtype=jnp.bfloat16, out_dtype=None):
    """Faithful BertClsPooler.forward on (B, H_in): tanh(x @ W^T + b) -> (B, H_out).

    weight is in PyTorch nn.Linear layout (H_out, H_in); bias is (H_out,).
    compute_dtype=jnp.bfloat16 (default) feeds the MXU bf16 operands with f32
    accumulation; pass compute_dtype=jnp.float32 for bit-closer-to-PyTorch numerics.
    This kernel is HBM-bound: pass bf16 hidden_states / out_dtype=jnp.bfloat16 when
    the surrounding model is bf16 to halve activation bytes.
    """
    return _run_pooler(hidden_states, weight, bias, cls_from_seq=False,
                       block_b=block_b, compute_dtype=compute_dtype, out_dtype=out_dtype)


def bert_cls_pooler_from_encoder(encoder_out, weight, bias, *, block_b=1024,
                                 compute_dtype=jnp.bfloat16, out_dtype=None):
    """Fused variant: pools token 0 straight out of the (B, S, H_in) encoder output.

    The CLS slice is fused into the x BlockSpec (squeezed seq dim pinned at block 0),
    so only the token-0 rows are ever DMA'd from HBM — no separate XLA slice pass.
    """
    return _run_pooler(encoder_out, weight, bias, cls_from_seq=True,
                       block_b=block_b, compute_dtype=compute_dtype, out_dtype=out_dtype)


if __name__ == "__main__":
    # Small, lane-friendly shapes: batch=8, seq=4, hidden=128 (square pooler like BERT).
    B, S, H = 8, 4, 128
    key = jax.random.PRNGKey(0)
    k_x, k_w, k_b = jax.random.split(key, 3)

    bound = 1.0 / (H ** 0.5)   # nn.Linear-style uniform init
    encoder_out = jax.random.normal(k_x, (B, S, H), dtype=jnp.float32)
    weight = jax.random.uniform(k_w, (H, H), dtype=jnp.float32, minval=-bound, maxval=bound)
    bias = jax.random.uniform(k_b, (H,), dtype=jnp.float32, minval=-bound, maxval=bound)

    cls = encoder_out[:, 0, :]
    ref_f32 = jnp.tanh(cls @ weight.T + bias)

    # Path 1: module-faithful (B, H) -> (B, H), default bf16 MXU operands.
    out = jax.block_until_ready(bert_cls_pooler(cls, weight, bias))
    assert out.shape == (B, H) and out.dtype == cls.dtype
    assert jnp.allclose(out, ref_f32, atol=3e-2), float(jnp.max(jnp.abs(out - ref_f32)))

    # Path 1b: f32 compute path (tighter tolerance, closer to PyTorch numerics).
    out_f32 = jax.block_until_ready(
        bert_cls_pooler(cls, weight, bias, compute_dtype=jnp.float32))
    assert jnp.allclose(out_f32, ref_f32, atol=1e-5), float(jnp.max(jnp.abs(out_f32 - ref_f32)))

    # Path 2: fused CLS-slice straight from the (B, S, H) encoder output.
    out2 = jax.block_until_ready(bert_cls_pooler_from_encoder(encoder_out, weight, bias))
    assert out2.shape == (B, H)
    assert jnp.allclose(out2, ref_f32, atol=3e-2)
    assert jnp.allclose(out2, out, atol=1e-6)

    # Path 3: multi-tile grid with a partial (masked) last tile: tm=16, grid=2 for B=24.
    B2 = 24
    cls2 = jax.random.normal(jax.random.PRNGKey(1), (B2, H), dtype=jnp.float32)
    ref2 = jnp.tanh(cls2 @ weight.T + bias)
    out3 = jax.block_until_ready(bert_cls_pooler(cls2, weight, bias, block_b=16))
    assert out3.shape == (B2, H)
    assert jnp.allclose(out3, ref2, atol=3e-2), float(jnp.max(jnp.abs(out3 - ref2)))

    print("KERNEL_OK")
</pallas_src>

<mosaic_0001>
module attributes {stable_mosaic.version = 11 : i64} {
  func.func @_pooler_kernel(%arg0: i32, %arg1: memref<8x128xf32, #tpu.memory_space<vmem>>, %arg2: memref<128x128xbf16, #tpu.memory_space<vmem>>, %arg3: memref<1x128xf32, #tpu.memory_space<vmem>>, %arg4: memref<8x128xf32, #tpu.memory_space<vmem>>) attributes {dimension_semantics = [#tpu.dimension_semantics<parallel>], iteration_bounds = array<i64: 1>, scalar_prefetch = 0 : i64, scratch_operands = 0 : i64, tpu.core_type = #tpu.core_type<tc>, window_params = [{transform_indices = @transform_0, window_bounds = array<i64: 8, 128>}, {pipeline_mode = #tpu.pipeline_mode<synchronous>, transform_indices = @transform_1, window_bounds = array<i64: 128, 128>}, {pipeline_mode = #tpu.pipeline_mode<synchronous>, transform_indices = @transform_2, window_bounds = array<i64: 1, 128>}, {transform_indices = @transform_3, window_bounds = array<i64: 8, 128>}]} {
    %c0 = arith.constant 0 : index
    %c0_0 = arith.constant 0 : index
    %0 = vector.load %arg1[%c0, %c0_0] : memref<8x128xf32, #tpu.memory_space<vmem>>, vector<8x128xf32>
    %1 = arith.truncf %0 : vector<8x128xf32> to vector<8x128xbf16>
    %c0_1 = arith.constant 0 : index
    %c0_2 = arith.constant 0 : index
    %2 = vector.load %arg2[%c0_1, %c0_2] : memref<128x128xbf16, #tpu.memory_space<vmem>>, vector<128x128xbf16>
    %cst = arith.constant dense<0.000000e+00> : vector<8x128xf32>
    %3 = tpu.matmul %1, %2, %cst {dimension_numbers = #tpu.dot_dimension_numbers<[1], [0], [0], [1], [0, 0, 1, 1], [], []>} : vector<8x128xbf16>, vector<128x128xbf16>, vector<8x128xf32> -> vector<8x128xf32>
    %c0_3 = arith.constant 0 : index
    %c0_4 = arith.constant 0 : index
    %4 = vector.load %arg3[%c0_3, %c0_4] : memref<1x128xf32, #tpu.memory_space<vmem>>, vector<1x128xf32>
    %5 = vector.broadcast %4 : vector<1x128xf32> to vector<8x128xf32>
    %6 = arith.addf %3, %5 : vector<8x128xf32>
    %7 = math.tanh %6 : vector<8x128xf32>
    %c0_5 = arith.constant 0 : index
    %c0_6 = arith.constant 0 : index
    %8 = vector.load %arg4[%c0_5, %c0_6] : memref<8x128xf32, #tpu.memory_space<vmem>>, vector<8x128xf32>
    tpu.vector_store %arg4[%c0_5, %c0_6], %7 {strides = array<i32>} : memref<8x128xf32, #tpu.memory_space<vmem>>, vector<8x128xf32>,
    return
  }
  func.func @transform_0(%arg0: i32) -> (i32, i32) {
    %c0_i32 = arith.constant 0 : i32
    %c0_i32_0 = arith.constant 0 : i32
    return %arg0, %c0_i32 : i32, i32
  }
  func.func @transform_1(%arg0: i32) -> (i32, i32) {
    %c0_i32 = arith.constant 0 : i32
    %c0_i32_0 = arith.constant 0 : i32
    %c0_i32_1 = arith.constant 0 : i32
    return %c0_i32, %c0_i32_0 : i32, i32
  }
  func.func @transform_2(%arg0: i32) -> (i32, i32) {
    %c0_i32 = arith.constant 0 : i32
    %c0_i32_0 = arith.constant 0 : i32
    %c0_i32_1 = arith.constant 0 : i32
    return %c0_i32, %c0_i32_0 : i32, i32
  }
  func.func @transform_3(%arg0: i32) -> (i32, i32) {
    %c0_i32 = arith.constant 0 : i32
    %c0_i32_0 = arith.constant 0 : i32
    return %arg0, %c0_i32 : i32, i32
  }
}

module attributes {stable_mosaic.version = 11 : i64} {
  func.func @_pooler_kernel(%arg0: i32, %arg1: memref<8x128xf32, #tpu.memory_space<vmem>>, %arg2: memref<128x128xbf16, #tpu.memory_space<vmem>>, %arg3: memref<1x128xf32, #tpu.memory_space<vmem>>, %arg4: memref<8x128xf32, #tpu.memory_space<vmem>>) attributes {dimension_semantics = [#tpu.dimension_semantics<parallel>], iteration_bounds = array<i64: 1>, scalar_prefetch = 0 : i64, scratch_operands = 0 : i64, tpu.core_type = #tpu.core_type<tc>, window_params = [{transform_indices = @transform_0, window_bounds = array<i64: 8, 128>}, {pipeline_mode = #tpu.pipeline_mode<synchronous>, transform_indices = @transform_1, window_bounds = array<i64: 128, 128>}, {pipeline_mode = #tpu.pipeline_mode<synchronous>, transform_indices = @transform_2, window_bounds = array<i64: 1, 128>}, {transform_indices = @transform_3, window_bounds = array<i64: 8, 128>}]} {
    %c0 = arith.constant 0 : index
    %c0_0 = arith.constant 0 : index
    %0 = vector.load %arg1[%c0, %c0_0] : memref<8x128xf32, #tpu.memory_space<vmem>>, vector<8x128xf32>
    %1 = arith.truncf %0 : vector<8x128xf32> to vector<8x128xbf16>
    %c0_1 = arith.constant 0 : index
    %c0_2 = arith.constant 0 : index
    %2 = vector.load %arg2[%c0_1, %c0_2] : memref<128x128xbf16, #tpu.memory_space<vmem>>, vector<128x128xbf16>
    %cst = arith.constant dense<0.000000e+00> : vector<8x128xf32>
    %3 = tpu.matmul %1, %2, %cst {dimension_numbers = #tpu.dot_dimension_numbers<[1], [0], [0], [1], [0, 0, 1, 1], [], []>} : vector<8x128xbf16>, vector<128x128xbf16>, vector<8x128xf32> -> vector<8x128xf32>
    %c0_3 = arith.constant 0 : index
    %c0_4 = arith.constant 0 : index
    %4 = vector.load %arg3[%c0_3, %c0_4] : memref<1x128xf32, #tpu.memory_space<vmem>>, vector<1x128xf32>
    %5 = vector.broadcast %4 : vector<1x128xf32> to vector<8x128xf32>
    %6 = arith.addf %3, %5 : vector<8x128xf32>
    %7 = math.tanh %6 : vector<8x128xf32>
    %c0_5 = arith.constant 0 : index
    %c0_6 = arith.constant 0 : index
    %8 = vector.load %arg4[%c0_5, %c0_6] : memref<8x128xf32, #tpu.memory_space<vmem>>, vector<8x128xf32>
    tpu.vector_store %arg4[%c0_5, %c0_6], %7 {strides = array<i32>} : memref<8x128xf32, #tpu.memory_space<vmem>>, vector<8x128xf32>,
    return
  }
  func.func @transform_0(%arg0: i32) -> (i32, i32) {
    %c0_i32 = arith.constant 0 : i32
    %c0_i32_0 = arith.constant 0 : i32
    return %arg0, %c0_i32 : i32, i32
  }
  func.func @transform_1(%arg0: i32) -> (i32, i32) {
    %c0_i32 = arith.constant 0 : i32
    %c0_i32_0 = arith.constant 0 : i32
    %c0_i32_1 = arith.constant 0 : i32
    return %c0_i32, %c0_i32_0 : i32, i32
  }
  func.func @transform_2(%arg0: i32) -> (i32, i32) {
    %c0_i32 = arith.constant 0 : i32
    %c0_i32_0 = arith.constant 0 : i32
    %c0_i32_1 = arith.constant 0 : i32
    return %c0_i32, %c0_i32_0 : i32, i32
  }
  func.func @transform_3(%arg0: i32) -> (i32, i32) {
    %c0_i32 = arith.constant 0 : i32
    %c0_i32_0 = arith.constant 0 : i32
    return %arg0, %c0_i32 : i32, i32
  }
}

</mosaic_0001>

<llo_original>
// kernel: tpu_custom_call.1
$region0: #{tpu_custom_call.1}
  #allocation0 [shape = 'u32[]', space=smem, size = 0x4, offset = 0x4, fixed_abs, tag = 'smem constant byte address 0x4 - core index']
  #allocation1 [shape = 'u32[144,128]{1,0:T(1,128)}', space=vmem, size = 0x12000, scoped, tag = 'internal scratch']
  %s0 = inlined_call_operand.hbm [shape: f32[8,128], index: 0, kind: input, shape index: {}]
  %s1 = inlined_call_operand.hbm [shape: bf16[128,128], index: 1, kind: input, shape index: {}]
  %s2 = inlined_call_operand.vmem [shape: f32[1,128], index: 2, kind: input, shape index: {}]
  %s3 = inlined_call_operand.hbm [shape: f32[8,128], index: 3, kind: output, shape index: {}]
  %s4 = sld [smem:[#allocation0]]
  $region30: #{tpu_custom_call.1} parent=0
    _
  %s6 = ssub.s32 1, %s4
  %s7 = scalar_select 0, %s6, %s4
  $region1: #{tpu_custom_call.1} parent=0
    #allocation2 [shape = 'u8[4096]{0}', space=vmem, size = 0x1000, scoped, tag = 'input window, operand 0, single buffered']
    #allocation3 [shape = 's32[1]{0}', space=sflag, size = 0x4, scoped, tag = 'scoped memory for tpu_custom_call.1']
    #allocation4 [shape = 's32[1]{0}', space=sflag, size = 0x4, scoped, tag = 'scoped memory for tpu_custom_call.1']
    #allocation5 [shape = 'u8[32768]{0}', space=vmem, size = 0x8000, scoped, tag = 'input window, operand 1, single buffered']
    #allocation6 [shape = 's32[1]{0}', space=sflag, size = 0x4, scoped, tag = 'scoped memory for tpu_custom_call.1']
    #allocation7 [shape = 'u8[4096]{0}', space=vmem, size = 0x1000, scoped, tag = 'output window, operand 0, single buffered']
    %8 = vsyncpa [#allocation3], 0
    %9 = vsyncpa [#allocation6], 0
    %10 = vsyncpa [#allocation4], 0
    // Predicated region
    $region2: #{tpu_custom_call.1} parent=1 // pred_check
      _
    $region3: #{tpu_custom_call.1} parent=1 // pred_check_branch
      %12 = sbr.rel (0) target = $region5
    $region4: #{tpu_custom_call.1} parent=1 // pred_region
      %s14 = ssub.s32 128, 128
      %15 = vsyncadd [#allocation3], %s14
      %s17 = sshll.u32 [#allocation2], 4
      %s18 = int_to_ptr.vmem [resolvable:$true] %s17
      %20 = dma.hbm_to_vmem [thread:$0]  %s0, 128, %s18, [#allocation3]
    $region5: #{tpu_custom_call.1} parent=1 // pred_fallthru
      _
    // Predicated region
    $region6: #{tpu_custom_call.1} parent=1 // pred_check
      _
    $region7: #{tpu_custom_call.1} parent=1 // pred_check_branch
      %22 = sbr.rel (0) target = $region9
    $region8: #{tpu_custom_call.1} parent=1 // pred_region
      %s24 = ssub.s32 1024, 1024
      %25 = vsyncadd [#allocation6], %s24
      %s26 = sshll.u32 [#allocation5], 4
      %s27 = int_to_ptr.vmem [resolvable:$true] %s26
      %32 = dma.hbm_to_vmem [thread:$0]  %s1, 1024, %s27, [#allocation6], 64, 64, 4
    $region9: #{tpu_custom_call.1} parent=1 // pred_fallthru
      _
    // Predicated region
    $region10: #{tpu_custom_call.1} parent=1 // pred_check
      _
    $region11: #{tpu_custom_call.1} parent=1 // pred_check_branch
      %34 = sbr.rel (0) target = $region13
    $region12: #{tpu_custom_call.1} parent=1 // pred_region
      _
    $region13: #{tpu_custom_call.1} parent=1 // pred_fallthru
      _
    // Predicated region
    $region14: #{tpu_custom_call.1} parent=1 // pred_check
      _
    $region15: #{tpu_custom_call.1} parent=1 // pred_check_branch
      %36 = sbr.rel (0) target = $region17
    $region16: #{tpu_custom_call.1} parent=1 // pred_region
      %37 = dma.done [#allocation3], 128
    $region17: #{tpu_custom_call.1} parent=1 // pred_fallthru
      _
    // Predicated region
    $region18: #{tpu_custom_call.1} parent=1 // pred_check
      _
    $region19: #{tpu_custom_call.1} parent=1 // pred_check_branch
      %39 = sbr.rel (0) target = $region21
    $region20: #{tpu_custom_call.1} parent=1 // pred_region
      %40 = dma.done [#allocation6], 1024
    $region21: #{tpu_custom_call.1} parent=1 // pred_fallthru
      _
    %v42 = vld [vmem:[#allocation2] sm:$0xff]
    %v43 = vpack.c.bf16 %v42, %v42
    %v44 = vld [vmem:[#allocation5] sm:$0xf]
    %v45 = vld [vmem:[#allocation5 + $0x4] sm:$0xf]
    %v46 = vld [vmem:[#allocation5 + $0x8] sm:$0xf]
    %v47 = vld [vmem:[#allocation5 + $0xc] sm:$0xf]
    %v48 = vld [vmem:[#allocation5 + $0x10] sm:$0xf]
    %v49 = vld [vmem:[#allocation5 + $0x14] sm:$0xf]
    %v50 = vld [vmem:[#allocation5 + $0x18] sm:$0xf]
    %v51 = vld [vmem:[#allocation5 + $0x1c] sm:$0xf]
    %v52 = vld [vmem:[#allocation5 + $0x20] sm:$0xf]
    %v53 = vld [vmem:[#allocation5 + $0x24] sm:$0xf]
    %v54 = vld [vmem:[#allocation5 + $0x28] sm:$0xf]
    %v55 = vld [vmem:[#allocation5 + $0x2c] sm:$0xf]
    %v56 = vld [vmem:[#allocation5 + $0x30] sm:$0xf]
    %v57 = vld [vmem:[#allocation5 + $0x34] sm:$0xf]
    %v58 = vld [vmem:[#allocation5 + $0x38] sm:$0xf]
    %v59 = vld [vmem:[#allocation5 + $0x3c] sm:$0xf]
    %v60 = vld [vmem:[%s2] sm:$0x1]
    %v62 = vlaneseq
    %v63 = vshrl.u32 %v62, 7
    %v64 = vsub.s32 0, %v63
    %v65 = vrot.slane %v60, %v64
    %v83 = vunpack.c.l.b16 %v44
    %v84 = vunpack.c.l.b16 %v45
    %v85 = vunpack.c.l.b16 %v46
    %v86 = vunpack.c.l.b16 %v47
    %v87 = vunpack.c.l.b16 %v48
    %v88 = vunpack.c.l.b16 %v49
    %v89 = vunpack.c.l.b16 %v50
    %v90 = vunpack.c.l.b16 %v51
    %v91 = vunpack.c.l.b16 %v52
    %v92 = vunpack.c.l.b16 %v53
    %v93 = vunpack.c.l.b16 %v54
    %v94 = vunpack.c.l.b16 %v55
    %v95 = vunpack.c.l.b16 %v56
    %v96 = vunpack.c.l.b16 %v57
    %v97 = vunpack.c.l.b16 %v58
    %v98 = vunpack.c.l.b16 %v59
    %v99 = vpack.c.b16 %v84, %v83
    %v100 = vpack.c.b16 %v86, %v85
    %v101 = vpack.c.b16 %v88, %v87
    %v102 = vpack.c.b16 %v90, %v89
    %v103 = vpack.c.b16 %v92, %v91
    %v104 = vpack.c.b16 %v94, %v93
    %v105 = vpack.c.b16 %v96, %v95
    %v106 = vpack.c.b16 %v98, %v97
    %115 = vmatprep.subr.bf16.mxu0 0
    %116 = vmatpush1.bf16.msra.mxu0 %v106
    %117 = vmatprep.subr.bf16.mxu0 0
    %118 = vmatpush1.bf16.msra.mxu0 %v105
    %119 = vmatprep.subr.bf16.mxu0 0
    %120 = vmatpush1.bf16.msra.mxu0 %v104
    %121 = vmatprep.subr.bf16.mxu0 0
    %122 = vmatpush1.bf16.msra.mxu0 %v103
    %123 = vmatprep.subr.bf16.mxu0 0
    %124 = vmatpush1.bf16.msra.mxu0 %v102
    %125 = vmatprep.subr.bf16.mxu0 0
    %126 = vmatpush1.bf16.msra.mxu0 %v101
    %127 = vmatprep.subr.bf16.mxu0 0
    %128 = vmatpush1.bf16.msra.mxu0 %v100
    %129 = vmatprep.subr.bf16.mxu0 0
    %130 = vmatpush1.bf16.msra.mxu0 %v99
    %131 = vmatprep.subr.bf16.mxu0 0
    %132 = vmatpush2.bf16.msra.mxu0 0
    %133 = vmatprep.subr.bf16.mxu0 0
    %134 = vmatpush2.bf16.msra.mxu0 0
    %135 = vmatprep.subr.bf16.mxu0 0
    %136 = vmatpush2.bf16.msra.mxu0 0
    %137 = vmatprep.subr.bf16.mxu0 0
    %138 = vmatpush2.bf16.msra.mxu0 0
    %139 = vmatprep.subr.bf16.mxu0 0
    %140 = vmatpush2.bf16.msra.mxu0 0
    %141 = vmatprep.subr.bf16.mxu0 0
    %142 = vmatpush2.bf16.msra.mxu0 0
    %143 = vmatprep.subr.bf16.mxu0 0
    %144 = vmatpush2.bf16.msra.mxu0 0
    %145 = vmatprep.subr.bf16.mxu0 0
    %146 = vmatpush2.bf16.msra.mxu0 0
    %147 = vmatprep.mubr.bf16.mxu0 0
    %148 = vmatmul.mubr.bf16.gmra.mxu0 %v43
    %v149 = vpop.f32.mrf.mxu0
    %v150 = vadd.f32 %v65, %v149
    %v151 = vpop.f32.mrf.mxu0
    %v152 = vpop.f32.mrf.mxu0
    %v153 = vpop.f32.mrf.mxu0
    %154 = vdwg.mxu0
    %v155 = vtanh.pop %v150
    %156 = vst [vmem:[#allocation7] sm:$0xff] %v155
    // Predicated region
    $region22: #{tpu_custom_call.1} parent=1 // pred_check
      _
    $region23: #{tpu_custom_call.1} parent=1 // pred_check_branch
      %158 = sbr.rel (0) target = $region25
    $region24: #{tpu_custom_call.1} parent=1 // pred_region
      %s160 = ssub.s32 128, 128
      %161 = vsyncadd [#allocation4], %s160
      %s163 = sshll.u32 [#allocation7], 4
      %s164 = int_to_ptr.vmem [resolvable:$true] %s163
      %166 = dma.vmem_to_hbm [thread:$0]  %s164, 128, %s3, [#allocation4]
    $region25: #{tpu_custom_call.1} parent=1 // pred_fallthru
      _
    // Predicated region
    $region26: #{tpu_custom_call.1} parent=1 // pred_check
      _
    $region27: #{tpu_custom_call.1} parent=1 // pred_check_branch
      %168 = sbr.rel (0) target = $region29
    $region28: #{tpu_custom_call.1} parent=1 // pred_region
      %169 = dma.done [#allocation4], 128
    $region29: #{tpu_custom_call.1} parent=1 // pred_fallthru
      _
    %170 = vsyncpa [#allocation3], 1
    %171 = vsyncpa [#allocation6], 1
    %172 = vsyncpa [#allocation4], 1

// kernel: tpu_custom_call.1
$region0: #{tpu_custom_call.1}
  #allocation0 [shape = 'u32[]', space=smem, size = 0x4, offset = 0x4, fixed_abs, tag = 'smem constant byte address 0x4 - core index']
  #allocation1 [shape = 'u32[144,128]{1,0:T(1,128)}', space=vmem, size = 0x12000, scoped, tag = 'internal scratch']
  %s0 = inlined_call_operand.hbm [shape: f32[8,128], index: 0, kind: input, shape index: {}]
  %s1 = inlined_call_operand.hbm [shape: bf16[128,128], index: 1, kind: input, shape index: {}]
  %s2 = inlined_call_operand.vmem [shape: f32[1,128], index: 2, kind: input, shape index: {}]
  %s3 = inlined_call_operand.hbm [shape: f32[8,128], index: 3, kind: output, shape index: {}]
  %s4 = sld [smem:[#allocation0]]
  $region30: #{tpu_custom_call.1} parent=0
    _
  %s6 = ssub.s32 1, %s4
  %s7 = scalar_select 0, %s6, %s4
  $region1: #{tpu_custom_call.1} parent=0
    #allocation2 [shape = 'u8[4096]{0}', space=vmem, size = 0x1000, scoped, tag = 'input window, operand 0, single buffered']
    #allocation3 [shape = 's32[1]{0}', space=sflag, size = 0x4, scoped, tag = 'scoped memory for tpu_custom_call.1']
    #allocation4 [shape = 's32[1]{0}', space=sflag, size = 0x4, scoped, tag = 'scoped memory for tpu_custom_call.1']
    #allocation5 [shape = 'u8[32768]{0}', space=vmem, size = 0x8000, scoped, tag = 'input window, operand 1, single buffered']
    #allocation6 [shape = 's32[1]{0}', space=sflag, size = 0x4, scoped, tag = 'scoped memory for tpu_custom_call.1']
    #allocation7 [shape = 'u8[4096]{0}', space=vmem, size = 0x1000, scoped, tag = 'output window, operand 0, single buffered']
    %8 = vsyncpa [#allocation3], 0
    %9 = vsyncpa [#allocation6], 0
    %10 = vsyncpa [#allocation4], 0
    // Predicated region
    $region2: #{tpu_custom_call.1} parent=1 // pred_check
      _
    $region3: #{tpu_custom_call.1} parent=1 // pred_check_branch
      %12 = sbr.rel (0) target = $region5
    $region4: #{tpu_custom_call.1} parent=1 // pred_region
      %s14 = ssub.s32 128, 128
      %15 = vsyncadd [#allocation3], %s14
      %s17 = sshll.u32 [#allocation2], 4
      %s18 = int_to_ptr.vmem [resolvable:$true] %s17
      %20 = dma.hbm_to_vmem [thread:$0]  %s0, 128, %s18, [#allocation3]
    $region5: #{tpu_custom_call.1} parent=1 // pred_fallthru
      _
    // Predicated region
    $region6: #{tpu_custom_call.1} parent=1 // pred_check
      _
    $region7: #{tpu_custom_call.1} parent=1 // pred_check_branch
      %22 = sbr.rel (0) target = $region9
    $region8: #{tpu_custom_call.1} parent=1 // pred_region
      %s24 = ssub.s32 1024, 1024
      %25 = vsyncadd [#allocation6], %s24
      %s26 = sshll.u32 [#allocation5], 4
      %s27 = int_to_ptr.vmem [resolvable:$true] %s26
      %32 = dma.hbm_to_vmem [thread:$0]  %s1, 1024, %s27, [#allocation6], 64, 64, 4
    $region9: #{tpu_custom_call.1} parent=1 // pred_fallthru
      _
    // Predicated region
    $region10: #{tpu_custom_call.1} parent=1 // pred_check
      _
    $region11: #{tpu_custom_call.1} parent=1 // pred_check_branch
      %34 = sbr.rel (0) target = $region13
    $region12: #{tpu_custom_call.1} parent=1 // pred_region
      _
    $region13: #{tpu_custom_call.1} parent=1 // pred_fallthru
      _
    // Predicated region
    $region14: #{tpu_custom_call.1} parent=1 // pred_check
      _
    $region15: #{tpu_custom_call.1} parent=1 // pred_check_branch
      %36 = sbr.rel (0) target = $region17
    $region16: #{tpu_custom_call.1} parent=1 // pred_region
      %37 = dma.done [#allocation3], 128
    $region17: #{tpu_custom_call.1} parent=1 // pred_fallthru
      _
    // Predicated region
    $region18: #{tpu_custom_call.1} parent=1 // pred_check
      _
    $region19: #{tpu_custom_call.1} parent=1 // pred_check_branch
      %39 = sbr.rel (0) target = $region21
    $region20: #{tpu_custom_call.1} parent=1 // pred_region
      %40 = dma.done [#allocation6], 1024
    $region21: #{tpu_custom_call.1} parent=1 // pred_fallthru
      _
    %v42 = vld [vmem:[#allocation2] sm:$0xff]
    %v43 = vpack.c.bf16 %v42, %v42
    %v44 = vld [vmem:[#allocation5] sm:$0xf]
    %v45 = vld [vmem:[#allocation5 + $0x4] sm:$0xf]
    %v46 = vld [vmem:[#allocation5 + $0x8] sm:$0xf]
    %v47 = vld [vmem:[#allocation5 + $0xc] sm:$0xf]
    %v48 = vld [vmem:[#allocation5 + $0x10] sm:$0xf]
    %v49 = vld [vmem:[#allocation5 + $0x14] sm:$0xf]
    %v50 = vld [vmem:[#allocation5 + $0x18] sm:$0xf]
    %v51 = vld [vmem:[#allocation5 + $0x1c] sm:$0xf]
    %v52 = vld [vmem:[#allocation5 + $0x20] sm:$0xf]
    %v53 = vld [vmem:[#allocation5 + $0x24] sm:$0xf]
    %v54 = vld [vmem:[#allocation5 + $0x28] sm:$0xf]
    %v55 = vld [vmem:[#allocation5 + $0x2c] sm:$0xf]
    %v56 = vld [vmem:[#allocation5 + $0x30] sm:$0xf]
    %v57 = vld [vmem:[#allocation5 + $0x34] sm:$0xf]
    %v58 = vld [vmem:[#allocation5 + $0x38] sm:$0xf]
    %v59 = vld [vmem:[#allocation5 + $0x3c] sm:$0xf]
    %v60 = vld [vmem:[%s2] sm:$0x1]
    %v62 = vlaneseq
    %v63 = vshrl.u32 %v62, 7
    %v64 = vsub.s32 0, %v63
    %v65 = vrot.slane %v60, %v64
    %v83 = vunpack.c.l.b16 %v44
    %v84 = vunpack.c.l.b16 %v45
    %v85 = vunpack.c.l.b16 %v46
    %v86 = vunpack.c.l.b16 %v47
    %v87 = vunpack.c.l.b16 %v48
    %v88 = vunpack.c.l.b16 %v49
    %v89 = vunpack.c.l.b16 %v50
    %v90 = vunpack.c.l.b16 %v51
    %v91 = vunpack.c.l.b16 %v52
    %v92 = vunpack.c.l.b16 %v53
    %v93 = vunpack.c.l.b16 %v54
    %v94 = vunpack.c.l.b16 %v55
    %v95 = vunpack.c.l.b16 %v56
    %v96 = vunpack.c.l.b16 %v57
    %v97 = vunpack.c.l.b16 %v58
    %v98 = vunpack.c.l.b16 %v59
    %v99 = vpack.c.b16 %v84, %v83
    %v100 = vpack.c.b16 %v86, %v85
    %v101 = vpack.c.b16 %v88, %v87
    %v102 = vpack.c.b16 %v90, %v89
    %v103 = vpack.c.b16 %v92, %v91
    %v104 = vpack.c.b16 %v94, %v93
    %v105 = vpack.c.b16 %v96, %v95
    %v106 = vpack.c.b16 %v98, %v97
    %115 = vmatprep.subr.bf16.mxu0 0
    %116 = vmatpush1.bf16.msra.mxu0 %v106
    %117 = vmatprep.subr.bf16.mxu0 0
    %118 = vmatpush1.bf16.msra.mxu0 %v105
    %119 = vmatprep.subr.bf16.mxu0 0
    %120 = vmatpush1.bf16.msra.mxu0 %v104
    %121 = vmatprep.subr.bf16.mxu0 0
    %122 = vmatpush1.bf16.msra.mxu0 %v103
    %123 = vmatprep.subr.bf16.mxu0 0
    %124 = vmatpush1.bf16.msra.mxu0 %v102
    %125 = vmatprep.subr.bf16.mxu0 0
    %126 = vmatpush1.bf16.msra.mxu0 %v101
    %127 = vmatprep.subr.bf16.mxu0 0
    %128 = vmatpush1.bf16.msra.mxu0 %v100
    %129 = vmatprep.subr.bf16.mxu0 0
    %130 = vmatpush1.bf16.msra.mxu0 %v99
    %131 = vmatprep.subr.bf16.mxu0 0
    %132 = vmatpush2.bf16.msra.mxu0 0
    %133 = vmatprep.subr.bf16.mxu0 0
    %134 = vmatpush2.bf16.msra.mxu0 0
    %135 = vmatprep.subr.bf16.mxu0 0
    %136 = vmatpush2.bf16.msra.mxu0 0
    %137 = vmatprep.subr.bf16.mxu0 0
    %138 = vmatpush2.bf16.msra.mxu0 0
    %139 = vmatprep.subr.bf16.mxu0 0
    %140 = vmatpush2.bf16.msra.mxu0 0
    %141 = vmatprep.subr.bf16.mxu0 0
    %142 = vmatpush2.bf16.msra.mxu0 0
    %143 = vmatprep.subr.bf16.mxu0 0
    %144 = vmatpush2.bf16.msra.mxu0 0
    %145 = vmatprep.subr.bf16.mxu0 0
    %146 = vmatpush2.bf16.msra.mxu0 0
    %147 = vmatprep.mubr.bf16.mxu0 0
    %148 = vmatmul.mubr.bf16.gmra.mxu0 %v43
    %v149 = vpop.f32.mrf.mxu0
    %v150 = vadd.f32 %v65, %v149
    %v151 = vpop.f32.mrf.mxu0
    %v152 = vpop.f32.mrf.mxu0
    %v153 = vpop.f32.mrf.mxu0
    %154 = vdwg.mxu0
    %v155 = vtanh.pop %v150
    %156 = vst [vmem:[#allocation7] sm:$0xff] %v155
    // Predicated region
    $region22: #{tpu_custom_call.1} parent=1 // pred_check
      _
    $region23: #{tpu_custom_call.1} parent=1 // pred_check_branch
      %158 = sbr.rel (0) target = $region25
    $region24: #{tpu_custom_call.1} parent=1 // pred_region
      %s160 = ssub.s32 128, 128
      %161 = vsyncadd [#allocation4], %s160
      %s163 = sshll.u32 [#allocation7], 4
      %s164 = int_to_ptr.vmem [resolvable:$true] %s163
      %166 = dma.vmem_to_hbm [thread:$0]  %s164, 128, %s3, [#allocation4]
    $region25: #{tpu_custom_call.1} parent=1 // pred_fallthru
      _
    // Predicated region
    $region26: #{tpu_custom_call.1} parent=1 // pred_check
      _
    $region27: #{tpu_custom_call.1} parent=1 // pred_check_branch
      %168 = sbr.rel (0) target = $region29
    $region28: #{tpu_custom_call.1} parent=1 // pred_region
      %169 = dma.done [#allocation4], 128
    $region29: #{tpu_custom_call.1} parent=1 // pred_fallthru
      _
    %170 = vsyncpa [#allocation3], 1
    %171 = vsyncpa [#allocation6], 1
    %172 = vsyncpa [#allocation4], 1

</llo_original>
